<compile_context>
chip_gen: v7x
topology: tpu7x:2x2x1
jax: 0.10.0
libtpu: 0.0.40
codegen_flags: <defaults>
</compile_context>

<pallas_src>
import functools

import jax
import jax.numpy as jnp
from jax.experimental import pallas as pl
from jax.experimental.pallas import tpu as pltpu

_LANE = 128
_SUBLANE = 8
_TD_MAX = 8192          # max per-role feature-tile width for the D-blocked path
_FUSED_D_MAX = 4096     # max D for the fused single-DMA (nd == 1) path
_TB_MAX = 128           # max batch-tile height
_VMEM_LIMIT = 48 * 1024 * 1024


def _round_up(x: int, m: int) -> int:
    return ((x + m - 1) // m) * m


def _triplet_fused_kernel(x_ref, out_ref, *, d: int, margin: float):
    """nd == 1 fast path: one contiguous (TB, 3*d) tile per grid step.

    Columns [0,d) = anchor, [d,2d) = positive, [2d,3d) = negative; d is a
    multiple of 128 so the static slices below are lane-aligned (no relayout).
    """
    a = x_ref[:, 0:d].astype(jnp.float32)
    p = x_ref[:, d:2 * d].astype(jnp.float32)
    n = x_ref[:, 2 * d:3 * d].astype(jnp.float32)
    dp = a - p
    dn = a - n
    d_pos = jnp.sqrt(jnp.sum(dp * dp, axis=-1, keepdims=True))
    d_neg = jnp.sqrt(jnp.sum(dn * dn, axis=-1, keepdims=True))
    out_ref[...] = jnp.maximum(d_pos - d_neg + jnp.float32(margin), 0.0)


def _triplet_dblock_kernel(a_ref, p_ref, n_ref, out_ref, sp_ref, sn_ref, *, margin: float):
    """General path: grid = (batch tiles, D tiles); D-reduction is the last grid axis.

    a_ref/p_ref/n_ref : (TB, TD) anchor / positive / negative tiles (native dtype)
    out_ref           : (TB, 1)  per-triplet losses (written on the last D step)
    sp_ref, sn_ref    : (TB, 1)  f32 running sum-of-squares across the D axis
    """
    j = pl.program_id(1)

    @pl.when(j == 0)
    def _():
        sp_ref[...] = jnp.zeros_like(sp_ref)
        sn_ref[...] = jnp.zeros_like(sn_ref)

    a = a_ref[...].astype(jnp.float32)
    dp = a - p_ref[...].astype(jnp.float32)
    dn = a - n_ref[...].astype(jnp.float32)

    sp_ref[...] += jnp.sum(dp * dp, axis=-1, keepdims=True)
    sn_ref[...] += jnp.sum(dn * dn, axis=-1, keepdims=True)

    @pl.when(j == pl.num_programs(1) - 1)
    def _():
        d_pos = jnp.sqrt(sp_ref[...])
        d_neg = jnp.sqrt(sn_ref[...])
        out_ref[...] = jnp.maximum(d_pos - d_neg + jnp.float32(margin), 0.0)


def mean_triplet_batch_triplet_loss(batch: jax.Array, margin: float = 1.0) -> jax.Array:
    """batch: (B, 3, ...feature dims...) -> scalar float32 mean triplet loss."""
    B = batch.shape[0]
    assert batch.shape[1] == 3, "expected a batch of (anchor, positive, negative) triplets"

    x = batch.reshape(B, 3, -1)           # free reshape, keep native dtype
    D = x.shape[-1]

    # ---- D tiling: padding waste bounded to < nd*128 columns ----------------
    nd = max(1, pl.cdiv(D, _TD_MAX))
    TD = _round_up(pl.cdiv(D, nd), _LANE)
    D_pad = nd * TD
    if D_pad != D:
        # Zero-pad the feature axis only (zeros add nothing to the sums).
        # The batch axis is never padded.
        x = jnp.pad(x, ((0, 0), (0, 0), (0, D_pad - D)))

    # Lane-dense 2-D view: cols [0,D_pad)=anchor, [D_pad,2D_pad)=pos, [2D_pad,3D_pad)=neg.
    x2 = x.reshape(B, 3 * D_pad)

    # ---- batch tiling: no padding; >= 2 parallel tiles when B > 8 (v7x dual TC)
    TB = min(_TB_MAX, _round_up(pl.cdiv(B, 2), _SUBLANE))
    nb = pl.cdiv(B, TB)

    out_shape = jax.ShapeDtypeStruct((B, 1), jnp.float32)

    if nd == 1 and D_pad <= _FUSED_D_MAX:
        # Fast path: single contiguous DMA of (TB, 3*D_pad) per step.
        losses = pl.pallas_call(
            functools.partial(_triplet_fused_kernel, d=D_pad, margin=float(margin)),
            out_shape=out_shape,
            grid_spec=pltpu.PrefetchScalarGridSpec(
                num_scalar_prefetch=0,
                grid=(nb,),
                in_specs=[pl.BlockSpec((TB, 3 * D_pad), lambda i: (i, 0))],
                out_specs=pl.BlockSpec((TB, 1), lambda i: (i, 0)),
            ),
            compiler_params=pltpu.CompilerParams(
                dimension_semantics=("parallel",),
                vmem_limit_bytes=_VMEM_LIMIT,
            ),
        )(x2)
    else:
        # General path: three column-offset views of the same 2-D array,
        # D-reduction streamed over the last ("arbitrary") grid axis.
        losses = pl.pallas_call(
            functools.partial(_triplet_dblock_kernel, margin=float(margin)),
            out_shape=out_shape,
            grid_spec=pltpu.PrefetchScalarGridSpec(
                num_scalar_prefetch=0,
                grid=(nb, nd),
                in_specs=[
                    pl.BlockSpec((TB, TD), lambda i, j: (i, j)),
                    pl.BlockSpec((TB, TD), lambda i, j, _nd=nd: (i, j + _nd)),
                    pl.BlockSpec((TB, TD), lambda i, j, _nd=nd: (i, j + 2 * _nd)),
                ],
                out_specs=pl.BlockSpec((TB, 1), lambda i, j: (i, 0)),
                scratch_shapes=[
                    pltpu.VMEM((TB, 1), jnp.float32),
                    pltpu.VMEM((TB, 1), jnp.float32),
                ],
            ),
            compiler_params=pltpu.CompilerParams(
                dimension_semantics=("parallel", "arbitrary"),
                vmem_limit_bytes=_VMEM_LIMIT,
            ),
        )(x2, x2, x2)

    # Tiny final reduction in plain JAX; output is exactly (B, 1), no padded rows.
    return jnp.mean(losses[:, 0])


def _reference(batch: jax.Array, margin: float = 1.0) -> jax.Array:
    x = batch.reshape(batch.shape[0], 3, -1).astype(jnp.float32)
    dp = jnp.sqrt(jnp.sum((x[:, 0] - x[:, 1]) ** 2, axis=-1))
    dn = jnp.sqrt(jnp.sum((x[:, 0] - x[:, 2]) ** 2, axis=-1))
    return jnp.mean(jnp.maximum(dp - dn + margin, 0.0))


if __name__ == "__main__":
    key = jax.random.PRNGKey(0)
    k1, k2, k3 = jax.random.split(key, 3)

    # 1) Module-consistent small shape: batch of 2 triplets of 4x16x16 "images"
    #    (D = 1024 -> fused single-DMA path, one partial batch tile, no padding).
    batch1 = jax.random.normal(k1, (2, 3, 4, 16, 16), dtype=jnp.float32)
    out1 = mean_triplet_batch_triplet_loss(batch1, margin=1.0)
    jax.block_until_ready(out1)
    ref1 = _reference(batch1, margin=1.0)
    assert jnp.allclose(out1, ref1, rtol=1e-4, atol=1e-4), (out1, ref1)

    # 2) Ragged batch (B=10 -> two batch tiles, second one partial; no batch pad).
    batch2 = jax.random.normal(k2, (10, 3, 4, 16, 16), dtype=jnp.float32)
    out2 = mean_triplet_batch_triplet_loss(batch2, margin=1.0)
    jax.block_until_ready(out2)
    ref2 = _reference(batch2, margin=1.0)
    assert jnp.allclose(out2, ref2, rtol=1e-4, atol=1e-4), (out2, ref2)

    # 3) Ragged feature dim (D=9000 -> nd=2 D-blocked path with minimal zero-pad).
    batch3 = jax.random.normal(k3, (4, 3, 9000), dtype=jnp.float32)
    out3 = mean_triplet_batch_triplet_loss(batch3, margin=1.0)
    jax.block_until_ready(out3)
    ref3 = _reference(batch3, margin=1.0)
    assert jnp.allclose(out3, ref3, rtol=2e-3, atol=2e-3), (out3, ref3)

    print("KERNEL_OK")
</pallas_src>

<mosaic_0001>
module attributes {stable_mosaic.version = 11 : i64} {
  func.func @_triplet_fused_kernel(%arg0: i32, %arg1: memref<8x3072xf32, #tpu.memory_space<vmem>>, %arg2: memref<8x1xf32, #tpu.memory_space<vmem>>) attributes {dimension_semantics = [#tpu.dimension_semantics<parallel>], iteration_bounds = array<i64: 1>, scalar_prefetch = 0 : i64, scratch_operands = 0 : i64, tpu.core_type = #tpu.core_type<tc>, window_params = [{transform_indices = @transform_0, window_bounds = array<i64: 8, 3072>}, {transform_indices = @transform_1, window_bounds = array<i64: 8, 1>}]} {
    %c0 = arith.constant 0 : index
    %c0_0 = arith.constant 0 : index
    %0 = vector.load %arg1[%c0, %c0_0] : memref<8x3072xf32, #tpu.memory_space<vmem>>, vector<8x1024xf32>
    %c0_1 = arith.constant 0 : index
    %c1024 = arith.constant 1024 : index
    %1 = vector.load %arg1[%c0_1, %c1024] : memref<8x3072xf32, #tpu.memory_space<vmem>>, vector<8x1024xf32>
    %c0_2 = arith.constant 0 : index
    %c2048 = arith.constant 2048 : index
    %2 = vector.load %arg1[%c0_2, %c2048] : memref<8x3072xf32, #tpu.memory_space<vmem>>, vector<8x1024xf32>
    %3 = arith.subf %0, %1 : vector<8x1024xf32>
    %4 = arith.subf %0, %2 : vector<8x1024xf32>
    %5 = arith.mulf %3, %3 : vector<8x1024xf32>
    %cst = arith.constant dense<0.000000e+00> : vector<8xf32>
    %6 = vector.multi_reduction <add>, %5, %cst [1] : vector<8x1024xf32> to vector<8xf32>
    %7 = vector.shape_cast %6 : vector<8xf32> to vector<8x1xf32>
    %8 = math.sqrt %7 : vector<8x1xf32>
    %9 = arith.mulf %4, %4 : vector<8x1024xf32>
    %cst_3 = arith.constant dense<0.000000e+00> : vector<8xf32>
    %10 = vector.multi_reduction <add>, %9, %cst_3 [1] : vector<8x1024xf32> to vector<8xf32>
    %11 = vector.shape_cast %10 : vector<8xf32> to vector<8x1xf32>
    %12 = math.sqrt %11 : vector<8x1xf32>
    %13 = arith.subf %8, %12 : vector<8x1xf32>
    %cst_4 = arith.constant 1.000000e+00 : f32
    %14 = vector.broadcast %cst_4 : f32 to vector<8x1xf32>
    %15 = arith.addf %13, %14 : vector<8x1xf32>
    %cst_5 = arith.constant 0.000000e+00 : f32
    %16 = vector.broadcast %cst_5 : f32 to vector<8x1xf32>
    %17 = arith.maximumf %15, %16 : vector<8x1xf32>
    %c0_6 = arith.constant 0 : index
    %c0_7 = arith.constant 0 : index
    %18 = vector.load %arg2[%c0_6, %c0_7] : memref<8x1xf32, #tpu.memory_space<vmem>>, vector<8x1xf32>
    tpu.vector_store %arg2[%c0_6, %c0_7], %17 {strides = array<i32>} : memref<8x1xf32, #tpu.memory_space<vmem>>, vector<8x1xf32>,
    return
  }
  func.func @transform_0(%arg0: i32) -> (i32, i32) {
    %c0_i32 = arith.constant 0 : i32
    %c0_i32_0 = arith.constant 0 : i32
    return %arg0, %c0_i32 : i32, i32
  }
  func.func @transform_1(%arg0: i32) -> (i32, i32) {
    %c0_i32 = arith.constant 0 : i32
    %c0_i32_0 = arith.constant 0 : i32
    return %arg0, %c0_i32 : i32, i32
  }
}

</mosaic_0001>

<llo_original>
// kernel: tpu_custom_call.1
$region0: #{tpu_custom_call.1}
  #allocation0 [shape = 'u32[]', space=smem, size = 0x4, offset = 0x4, fixed_abs, tag = 'smem constant byte address 0x4 - core index']
  #allocation1 [shape = 'u32[144,128]{1,0:T(1,128)}', space=vmem, size = 0x12000, scoped, tag = 'internal scratch']
  %s0 = inlined_call_operand.hbm [shape: f32[2,3072], index: 0, kind: input, shape index: {}]
  %s1 = inlined_call_operand.vmem [shape: f32[2,1], index: 1, kind: output, shape index: {}]
  %s2 = sld [smem:[#allocation0]]
  $region48: #{tpu_custom_call.1} parent=0
    _
  %s4 = ssub.s32 1, %s2
  %s5 = scalar_select 0, %s4, %s2
  $region1: #{tpu_custom_call.1} parent=0
    #allocation2 [shape = 'u8[98304]{0}', space=vmem, size = 0x18000, scoped, tag = 'input window, operand 0, single buffered']
    #allocation3 [shape = 's32[1]{0}', space=sflag, size = 0x4, scoped, tag = 'scoped memory for tpu_custom_call.1']
    #allocation4 [shape = 'u8[4096]{0}', space=vmem, size = 0x1000, scoped, tag = 'output window, operand 0, single buffered']
    %6 = vsyncpa [#allocation3], 0
    // Predicated region
    $region2: #{tpu_custom_call.1} parent=1 // pred_check
      _
    $region3: #{tpu_custom_call.1} parent=1 // pred_check_branch
      %8 = sbr.rel (0) target = $region5
    $region4: #{tpu_custom_call.1} parent=1 // pred_region
      %s10 = ssub.s32 3072, 768
      %11 = vsyncadd [#allocation3], %s10
      %s12 = sshll.u32 [#allocation2], 4
      %s13 = int_to_ptr.vmem [resolvable:$true] %s12
      %18 = dma.hbm_to_vmem [thread:$0]  %s0, 768, %s13, [#allocation3], 768, 768, 48
    $region5: #{tpu_custom_call.1} parent=1 // pred_fallthru
      _
    // Predicated region
    $region6: #{tpu_custom_call.1} parent=1 // pred_check
      _
    $region7: #{tpu_custom_call.1} parent=1 // pred_check_branch
      %20 = sbr.rel (0) target = $region9
    $region8: #{tpu_custom_call.1} parent=1 // pred_region
      %21 = dma.done [#allocation3], 3072
    $region9: #{tpu_custom_call.1} parent=1 // pred_fallthru
      _
    %v22 = vld [vmem:[#allocation2] sm:$0xff]
    %v23 = vld [vmem:[#allocation2 + $0x8] sm:$0xff]
    %v24 = vld [vmem:[#allocation2 + $0x30] sm:$0xff]
    %v25 = vld [vmem:[#allocation2 + $0x38] sm:$0xff]
    %v26 = vld [vmem:[#allocation2 + $0x60] sm:$0xff]
    %v27 = vld [vmem:[#allocation2 + $0x68] sm:$0xff]
    %v28 = vld [vmem:[#allocation2 + $0x90] sm:$0xff]
    %v29 = vld [vmem:[#allocation2 + $0x98] sm:$0xff]
    %v30 = vld [vmem:[#allocation2 + $0x10] sm:$0xff]
    %v31 = vld [vmem:[#allocation2 + $0x18] sm:$0xff]
    %v32 = vld [vmem:[#allocation2 + $0x40] sm:$0xff]
    %v33 = vld [vmem:[#allocation2 + $0x48] sm:$0xff]
    %v34 = vld [vmem:[#allocation2 + $0x70] sm:$0xff]
    %v35 = vld [vmem:[#allocation2 + $0x78] sm:$0xff]
    %v36 = vld [vmem:[#allocation2 + $0xa0] sm:$0xff]
    %v37 = vld [vmem:[#allocation2 + $0xa8] sm:$0xff]
    %v38 = vld [vmem:[#allocation2 + $0x20] sm:$0xff]
    %v39 = vld [vmem:[#allocation2 + $0x28] sm:$0xff]
    %v40 = vld [vmem:[#allocation2 + $0x50] sm:$0xff]
    %v41 = vld [vmem:[#allocation2 + $0x58] sm:$0xff]
    %v42 = vld [vmem:[#allocation2 + $0x80] sm:$0xff]
    %v43 = vld [vmem:[#allocation2 + $0x88] sm:$0xff]
    %v44 = vld [vmem:[#allocation2 + $0xb0] sm:$0xff]
    %v45 = vld [vmem:[#allocation2 + $0xb8] sm:$0xff]
    %v46 = vsub.f32 %v22, %v30
    %v47 = vsub.f32 %v23, %v31
    %v48 = vsub.f32 %v24, %v32
    %v49 = vsub.f32 %v25, %v33
    %v50 = vsub.f32 %v26, %v34
    %v51 = vsub.f32 %v27, %v35
    %v52 = vsub.f32 %v28, %v36
    %v53 = vsub.f32 %v29, %v37
    %v54 = vsub.f32 %v22, %v38
    %v55 = vsub.f32 %v23, %v39
    %v56 = vsub.f32 %v24, %v40
    %v57 = vsub.f32 %v25, %v41
    %v58 = vsub.f32 %v26, %v42
    %v59 = vsub.f32 %v27, %v43
    %v60 = vsub.f32 %v28, %v44
    %v61 = vsub.f32 %v29, %v45
    %v62 = vmul.f32 %v46, %v46
    %v63 = vmul.f32 %v47, %v47
    %v64 = vmul.f32 %v48, %v48
    %v65 = vmul.f32 %v49, %v49
    %v66 = vmul.f32 %v50, %v50
    %v67 = vmul.f32 %v51, %v51
    %v68 = vmul.f32 %v52, %v52
    %v69 = vmul.f32 %v53, %v53
    %v78 = vcombine.low %v62, %v64
    %v79 = vcombine.high %v62, %v64
    %v80 = vcombine.low %v66, %v68
    %v81 = vcombine.high %v66, %v68
    %v83 = vunpack.c.l.s4 1983009808
    %v84 = vunpack.c.0.s8 %v83
    %v85 = vlaneseq
    %v86 = vshrl.u32 %v85, 7
    %v87 = vsub.s32 %v84, %v86
    %v88 = vrot.slane %v78, %v87
    %v90 = vunpack.c.l.s4 1983009808
    %v91 = vunpack.c.0.s8 %v90
    %v92 = vlaneseq
    %v93 = vshrl.u32 %v92, 7
    %v94 = vsub.s32 %v91, %v93
    %v95 = vrot.slane %v79, %v94
    %v97 = vunpack.c.l.s4 1983009808
    %v98 = vunpack.c.0.s8 %v97
    %v99 = vlaneseq
    %v100 = vshrl.u32 %v99, 7
    %v101 = vsub.s32 %v98, %v100
    %v102 = vrot.slane %v80, %v101
    %v104 = vunpack.c.l.s4 1983009808
    %v105 = vunpack.c.0.s8 %v104
    %v106 = vlaneseq
    %v107 = vshrl.u32 %v106, 7
    %v108 = vsub.s32 %v105, %v107
    %v109 = vrot.slane %v81, %v108
    %v110 = vcombine.low %v88, %v102
    %v111 = vcombine.high %v88, %v102
    %v112 = vcombine.low %v95, %v109
    %v113 = vcombine.high %v95, %v109
    %v114 = vcombine.low %v63, %v65
    %v115 = vcombine.high %v63, %v65
    %v116 = vcombine.low %v67, %v69
    %v117 = vcombine.high %v67, %v69
    %v119 = vunpack.c.l.s4 1983009808
    %v120 = vunpack.c.0.s8 %v119
    %v121 = vlaneseq
    %v122 = vshrl.u32 %v121, 7
    %v123 = vsub.s32 %v120, %v122
    %v124 = vrot.slane %v114, %v123
    %v126 = vunpack.c.l.s4 1983009808
    %v127 = vunpack.c.0.s8 %v126
    %v128 = vlaneseq
    %v129 = vshrl.u32 %v128, 7
    %v130 = vsub.s32 %v127, %v129
    %v131 = vrot.slane %v115, %v130
    %v133 = vunpack.c.l.s4 1983009808
    %v134 = vunpack.c.0.s8 %v133
    %v135 = vlaneseq
    %v136 = vshrl.u32 %v135, 7
    %v137 = vsub.s32 %v134, %v136
    %v138 = vrot.slane %v116, %v137
    %v140 = vunpack.c.l.s4 1983009808
    %v141 = vunpack.c.0.s8 %v140
    %v142 = vlaneseq
    %v143 = vshrl.u32 %v142, 7
    %v144 = vsub.s32 %v141, %v143
    %v145 = vrot.slane %v117, %v144
    %v146 = vcombine.low %v124, %v138
    %v147 = vcombine.high %v124, %v138
    %v148 = vcombine.low %v131, %v145
    %v149 = vcombine.high %v131, %v145
    %v158 = vadd.f32 %v110, %v111
    %v159 = vadd.f32 %v158, %v112
    %v160 = vadd.f32 %v159, %v113
    %v161 = vadd.f32 %v160, %v146
    %v162 = vadd.f32 %v161, %v147
    %v163 = vadd.f32 %v162, %v148
    %v164 = vadd.f32 %v163, %v149
    %165 = vadd.xlane.f32.xlu0 %v164
    %v166 = vpop.xlane.xlu0 %165
    %v167 = vrsqrt.pop %v166
    %v168 = vmul.f32 %v166, %v167
    %vm169 = vcmp.eq.f32.partialorder %v166, inf
    %v170 = vsel %vm169, %v166, %v168
    %vm171 = vcmp.eq.f32.partialorder %v166, 0.0
    %v172 = vand.u32 %v166, 2147483648
    %v173 = vsel %vm171, %v172, %v170
    %v174 = vmul.f32 %v54, %v54
    %v175 = vmul.f32 %v55, %v55
    %v176 = vmul.f32 %v56, %v56
    %v177 = vmul.f32 %v57, %v57
    %v178 = vmul.f32 %v58, %v58
    %v179 = vmul.f32 %v59, %v59
    %v180 = vmul.f32 %v60, %v60
    %v181 = vmul.f32 %v61, %v61
    %v190 = vcombine.low %v174, %v176
    %v191 = vcombine.high %v174, %v176
    %v192 = vcombine.low %v178, %v180
    %v193 = vcombine.high %v178, %v180
    %v195 = vunpack.c.l.s4 1983009808
    %v196 = vunpack.c.0.s8 %v195
    %v197 = vlaneseq
    %v198 = vshrl.u32 %v197, 7
    %v199 = vsub.s32 %v196, %v198
    %v200 = vrot.slane %v190, %v199
    %v202 = vunpack.c.l.s4 1983009808
    %v203 = vunpack.c.0.s8 %v202
    %v204 = vlaneseq
    %v205 = vshrl.u32 %v204, 7
    %v206 = vsub.s32 %v203, %v205
    %v207 = vrot.slane %v191, %v206
    %v209 = vunpack.c.l.s4 1983009808
    %v210 = vunpack.c.0.s8 %v209
    %v211 = vlaneseq
    %v212 = vshrl.u32 %v211, 7
    %v213 = vsub.s32 %v210, %v212
    %v214 = vrot.slane %v192, %v213
    %v216 = vunpack.c.l.s4 1983009808
    %v217 = vunpack.c.0.s8 %v216
    %v218 = vlaneseq
    %v219 = vshrl.u32 %v218, 7
    %v220 = vsub.s32 %v217, %v219
    %v221 = vrot.slane %v193, %v220
    %v222 = vcombine.low %v200, %v214
    %v223 = vcombine.high %v200, %v214
    %v224 = vcombine.low %v207, %v221
    %v225 = vcombine.high %v207, %v221
    %v226 = vcombine.low %v175, %v177
    %v227 = vcombine.high %v175, %v177
    %v228 = vcombine.low %v179, %v181
    %v229 = vcombine.high %v179, %v181
    %v231 = vunpack.c.l.s4 1983009808
    %v232 = vunpack.c.0.s8 %v231
    %v233 = vlaneseq
    %v234 = vshrl.u32 %v233, 7
    %v235 = vsub.s32 %v232, %v234
    %v236 = vrot.slane %v226, %v235
    %v238 = vunpack.c.l.s4 1983009808
    %v239 = vunpack.c.0.s8 %v238
    %v240 = vlaneseq
    %v241 = vshrl.u32 %v240, 7
    %v242 = vsub.s32 %v239, %v241
    %v243 = vrot.slane %v227, %v242
    %v245 = vunpack.c.l.s4 1983009808
    %v246 = vunpack.c.0.s8 %v245
    %v247 = vlaneseq
    %v248 = vshrl.u32 %v247, 7
    %v249 = vsub.s32 %v246, %v248
    %v250 = vrot.slane %v228, %v249
    %v252 = vunpack.c.l.s4 1983009808
    %v253 = vunpack.c.0.s8 %v252
    %v254 = vlaneseq
    %v255 = vshrl.u32 %v254, 7
    %v256 = vsub.s32 %v253, %v255
    %v257 = vrot.slane %v229, %v256
    %v258 = vcombine.low %v236, %v250
    %v259 = vcombine.high %v236, %v250
    %v260 = vcombine.low %v243, %v257
    %v261 = vcombine.high %v243, %v257
    %v270 = vadd.f32 %v222, %v223
    %v271 = vadd.f32 %v270, %v224
    %v272 = vadd.f32 %v271, %v225
    %v273 = vadd.f32 %v272, %v258
    %v274 = vadd.f32 %v273, %v259
    %v275 = vadd.f32 %v274, %v260
    %v276 = vadd.f32 %v275, %v261
    %277 = vadd.xlane.f32.xlu0 %v276
    %v278 = vpop.xlane.xlu0 %277
    %v279 = vrsqrt.pop %v278
    %v280 = vmul.f32 %v278, %v279
    %vm281 = vcmp.eq.f32.partialorder %v278, inf
    %v282 = vsel %vm281, %v278, %v280
    %vm283 = vcmp.eq.f32.partialorder %v278, 0.0
    %v284 = vand.u32 %v278, 2147483648
    %v285 = vsel %vm283, %v284, %v282
    %v286 = vsub.f32 %v173, %v285
    %v287 = vadd.f32 %v286, 1.0
    %v288 = vmax.f32 %v287, 0.0
    %vm289 = vcmask 7168
    %290 = vst.msk [vmem:[#allocation4] sm:$0xff] %vm289, %v288
    // Predicated region
    $region10: #{tpu_custom_call.1} parent=1 // pred_check
      _
    $region11: #{tpu_custom_call.1} parent=1 // pred_check_branch
      %292 = sbr.rel (0) target = $region13
    $region12: #{tpu_custom_call.1} parent=1 // pred_region
      // Predicated region
      $region14: #{tpu_custom_call.1} parent=12 // pred_check
        _
      $region15: #{tpu_custom_call.1} parent=12 // pred_check_branch
        %294 = sbr.rel (0) target = $region17
      $region16: #{tpu_custom_call.1} parent=12 // pred_region
        // Predicated region
        $region18: #{tpu_custom_call.1} parent=16 // pred_check
          _
        $region19: #{tpu_custom_call.1} parent=16 // pred_check_branch
          %296 = sbr.rel target = $region21
        $region20: #{tpu_custom_call.1} parent=16 // pred_region
          // Predicated region
          $region33: #{tpu_custom_call.1} parent=20 // pred_check
            _
          $region34: #{tpu_custom_call.1} parent=20 // pred_check_branch
            %311 = sbr.rel (0) target = $region36
          $region35: #{tpu_custom_call.1} parent=20 // pred_region
            loop: start=0, step=1, limit=1
            $region37: #{tpu_custom_call.1} parent=35 // loop_pre_header
              _
            $region38: #{tpu_custom_call.1} parent=35 // loop_header
              %s314 = sphi 0, %s318
              %p315 = scmp.ge.s32.totalorder %s314, 1
              %s319 = sphi [#allocation4], [#allocation4]
              %s320 = sphi %s1, %s1
            $region39: #{tpu_custom_call.1} parent=35 // loop_header_branch
              %317 = sbr.rel (%p315) target = $region43
            $region40: #{tpu_custom_call.1} parent=35 // loop_body
              %v321 = vld [vmem:[%s319] sm:$0x3]
              %322 = vst [vmem:[%s320] sm:$0x3] %v321
            $region41: #{tpu_custom_call.1} parent=35 // loop_footer
              %s318 = sadd.s32 1, %s314
            $region42: #{tpu_custom_call.1} parent=35 // loop_footer_branch
              %313 = sbr.rel target = $region38
            $region43: #{tpu_custom_call.1} parent=35 // loop_exit
              _
          $region36: #{tpu_custom_call.1} parent=20 // pred_fallthru
            _
        $region21: #{tpu_custom_call.1} parent=16 // pred_fallthru
          _
        // Predicated region
        $region22: #{tpu_custom_call.1} parent=16 // pred_check
          _
        $region23: #{tpu_custom_call.1} parent=16 // pred_check_branch
          %298 = sbr.rel (0) target = $region25
        $region24: #{tpu_custom_call.1} parent=16 // pred_region
          loop: start=0, step=1, limit=1
          $region26: #{tpu_custom_call.1} parent=24 // loop_pre_header
            _
          $region27: #{tpu_custom_call.1} parent=24 // loop_header
            %s301 = sphi 0, %s305
            %p302 = scmp.ge.s32.totalorder %s301, 1
            %s306 = sphi [#allocation4], [#allocation4]
            %s307 = sphi %s1, %s1
          $region28: #{tpu_custom_call.1} parent=24 // loop_header_branch
            %304 = sbr.rel (%p302) target = $region32
          $region29: #{tpu_custom_call.1} parent=24 // loop_body
            %v308 = vld [vmem:[%s306] sm:$0x3]
            %309 = vst [vmem:[%s307] sm:$0x3] %v308
          $region30: #{tpu_custom_call.1} parent=24 // loop_footer
            %s305 = sadd.s32 1, %s301
          $region31: #{tpu_custom_call.1} parent=24 // loop_footer_branch
            %300 = sbr.rel target = $region27
          $region32: #{tpu_custom_call.1} parent=24 // loop_exit
            _
        $region25: #{tpu_custom_call.1} parent=16 // pred_fallthru
          _
      $region17: #{tpu_custom_call.1} parent=12 // pred_fallthru
        _
      %323 = vnop
    $region13: #{tpu_custom_call.1} parent=1 // pred_fallthru
      _
    // Predicated region
    $region44: #{tpu_custom_call.1} parent=1 // pred_check
      _
    $region45: #{tpu_custom_call.1} parent=1 // pred_check_branch
      %325 = sbr.rel (0) target = $region47
    $region46: #{tpu_custom_call.1} parent=1 // pred_region
      _
    $region47: #{tpu_custom_call.1} parent=1 // pred_fallthru
      _
    %326 = vsyncpa [#allocation3], 1

</llo_original>
